<compile_context>
chip_gen: v7x
topology: tpu7x:2x2x1
jax: 0.10.0
libtpu: 0.0.40
codegen_flags: <defaults>
</compile_context>

<pallas_src>
import jax
import jax.numpy as jnp
from jax.experimental import pallas as pl
from jax.experimental.pallas import tpu as pltpu


# ----------------------------- helpers ------------------------------------ #

def _round_up(x, m):
    return ((x + m - 1) // m) * m


# ----------------------------- Pallas kernel ------------------------------ #

def _patch_matmul_kernel(x_ref, w_ref, b_ref, o_ref):
    # x: [TM, Kp] bf16, w: [Kp, Dp] bf16 (resident), b: [1, Dp] f32 (resident)
    acc = jnp.dot(x_ref[...], w_ref[...], preferred_element_type=jnp.float32)
    o_ref[...] = acc + b_ref[...]


def patch_matmul(patches, weight, bias, *, tile_m=1024):
    """(patches @ weight + bias) on the MXU, row-tiled and pipelined.

    patches: [P, K] (any float dtype), weight: [K, D], bias: [D]
    Returns f32 [P, D].
    """
    P, K = patches.shape
    D = weight.shape[1]

    # Lane-align the contraction and output-feature dims (zero padding is
    # numerically exact), sublane-align the row dim and pick the row tile.
    Kp = _round_up(K, 128)
    Dp = _round_up(D, 128)
    TM = min(tile_m, _round_up(P, 8))          # multiple of 8 by construction
    Pp = _round_up(P, TM)

    x = jnp.pad(patches.astype(jnp.bfloat16), ((0, Pp - P), (0, Kp - K)))
    w = jnp.pad(weight.astype(jnp.bfloat16), ((0, Kp - K), (0, Dp - D)))
    b = jnp.pad(bias.astype(jnp.float32), (0, Dp - D)).reshape(1, Dp)

    grid = (Pp // TM,)
    cost = pl.CostEstimate(
        flops=2 * Pp * Kp * Dp,
        transcendentals=0,
        bytes_accessed=Pp * Kp * 2 + Kp * Dp * 2 + Dp * 4 + Pp * Dp * 4,
    )

    out = pl.pallas_call(
        _patch_matmul_kernel,
        out_shape=jax.ShapeDtypeStruct((Pp, Dp), jnp.float32),
        grid=grid,
        in_specs=[
            pl.BlockSpec((TM, Kp), lambda i: (i, 0)),   # streamed row tiles
            pl.BlockSpec((Kp, Dp), lambda i: (0, 0)),   # weight resident
            pl.BlockSpec((1, Dp), lambda i: (0, 0)),    # bias resident
        ],
        out_specs=pl.BlockSpec((TM, Dp), lambda i: (i, 0)),
        compiler_params=pltpu.CompilerParams(
            dimension_semantics=("parallel",),          # independent row tiles
            vmem_limit_bytes=32 * 1024 * 1024,          # lean: safe on v7x too
        ),
        cost_estimate=cost,
    )(x, w, b)
    return out[:P, :D]


# ------------------------------- JAX glue ---------------------------------- #
# Patch extraction in channels-last order so the flattened K axis is
# (pz, ph, pw, C) with the innermost axes contiguous.

def _extract_patches_3d(x, patch):
    # x: [B, C, Z, H, W]  ->  patches [B*Zp*Hp*Wp, pz*ph*pw*C]
    B, C, Z, H, W = x.shape
    pz, ph, pw = patch
    Zp, Hp, Wp = Z // pz, H // ph, W // pw
    x = x.transpose(0, 2, 3, 4, 1)                       # B, Z, H, W, C
    x = x.reshape(B, Zp, pz, Hp, ph, Wp, pw, C)
    x = x.transpose(0, 1, 3, 5, 2, 4, 6, 7)              # B,Zp,Hp,Wp,pz,ph,pw,C
    return x.reshape(B * Zp * Hp * Wp, pz * ph * pw * C), (B, Zp, Hp, Wp)


def _extract_patches_2d(x, patch):
    # x: [B, C, H, W]  ->  patches [B*Hp*Wp, ph*pw*C]
    B, C, H, W = x.shape
    ph, pw = patch
    Hp, Wp = H // ph, W // pw
    x = x.transpose(0, 2, 3, 1)                          # B, H, W, C
    x = x.reshape(B, Hp, ph, Wp, pw, C)
    x = x.transpose(0, 1, 3, 2, 4, 5)                    # B, Hp, Wp, ph, pw, C
    return x.reshape(B * Hp * Wp, ph * pw * C), (B, Hp, Wp)


def _weight3d_to_matmul(w):
    # torch Conv3d weight [D, C, pz, ph, pw] -> [pz*ph*pw*C, D]
    D = w.shape[0]
    return w.transpose(2, 3, 4, 1, 0).reshape(-1, D)


def _weight2d_to_matmul(w):
    # torch Conv2d weight [D, C, ph, pw] -> [ph*pw*C, D]
    D = w.shape[0]
    return w.transpose(2, 3, 1, 0).reshape(-1, D)


def init_patch_embedding_params(key, patch_size, dim, surface_hw_padded):
    """Deterministic synthetic init (module shapes from __init__)."""
    pz, ph, pw = patch_size
    Hs, Ws = surface_hw_padded
    k = jax.random.split(key, 7)
    scale3d = 1.0 / jnp.sqrt(5.0 * pz * ph * pw)
    scale2d = 1.0 / jnp.sqrt(7.0 * ph * pw)
    params = {
        # nn.Conv3d(5, dim, patch_size, stride=patch_size)
        "w3d": jax.random.normal(k[0], (dim, 5, pz, ph, pw), jnp.float32) * scale3d,
        "b3d": jax.random.normal(k[1], (dim,), jnp.float32) * scale3d,
        # nn.Conv2d(7, dim, patch_size[1:], stride=patch_size[1:])
        "w2d": jax.random.normal(k[2], (dim, 7, ph, pw), jnp.float32) * scale2d,
        "b2d": jax.random.normal(k[3], (dim,), jnp.float32) * scale2d,
        # LoadConstantMask() -> three [1, 1, H_pad, W_pad] constant fields
        "land_mask": jax.random.normal(k[4], (1, 1, Hs, Ws), jnp.float32),
        "soil_type": jax.random.normal(k[5], (1, 1, Hs, Ws), jnp.float32),
        "topography": jax.random.normal(k[6], (1, 1, Hs, Ws), jnp.float32),
    }
    return params


def patch_embedding_forward(inp, inp_surface, params, patch_size):
    """Equivalent of PatchEmbedding.forward (intent of the Pangu pseudocode)."""
    pz, ph, pw = patch_size
    # TODO(synk): the original pad formula only yields patch-divisible extents
    # for specific input sizes (true for this toy config); Pangu production
    # shapes use pad-to-multiple semantics instead.
    pad_d = (pz - 1) * pz // 2
    pad_h = (ph - 1) * ph // 2
    pad_w = (pw - 1) * pw // 2

    # F.pad on NCDHW / NCHW
    inp = jnp.pad(inp, ((0, 0), (0, 0),
                        (pad_d, pad_d), (pad_h, pad_h), (pad_w, pad_w)))
    inp_surface = jnp.pad(inp_surface, ((0, 0), (0, 0),
                                        (pad_h, pad_h), (pad_w, pad_w)))

    B = inp_surface.shape[0]
    Hs, Ws = inp_surface.shape[2], inp_surface.shape[3]
    dim = params["w3d"].shape[0]

    # --- 3D patchify conv (upper-air) ------------------------------------- #
    patches3d, (_, Zp, Hp, Wp) = _extract_patches_3d(inp, (pz, ph, pw))
    x3d = patch_matmul(patches3d, _weight3d_to_matmul(params["w3d"]),
                       params["b3d"])
    x3d = x3d.reshape(B, Zp, Hp, Wp, dim)            # == permuted conv3d output

    # --- surface: concat constant masks, 2D patchify conv ------------------ #
    def bcast(m):
        return jnp.broadcast_to(m, (B, 1, Hs, Ws))
    surf = jnp.concatenate(
        [inp_surface, bcast(params["land_mask"]),
         bcast(params["soil_type"]), bcast(params["topography"])], axis=1)

    patches2d, (_, Hp2, Wp2) = _extract_patches_2d(surf, (ph, pw))
    x2d = patch_matmul(patches2d, _weight2d_to_matmul(params["w2d"]),
                       params["b2d"])
    x2d = x2d.reshape(B, Hp2, Wp2, dim)              # == permuted conv2d output

    # --- concat along the (pressure-level) depth axis, flatten ------------- #
    x = jnp.concatenate([x3d, x2d[:, None]], axis=1)   # [B, Zp+1, Hp, Wp, dim]
    x = x.reshape(B, (Zp + 1) * Hp * Wp, dim)
    return x


# --------------------------------- main ------------------------------------ #

if __name__ == "__main__":
    patch_size = (2, 2, 2)
    dim = 32
    B = 2

    key = jax.random.PRNGKey(0)
    k_in, k_surf, k_params = jax.random.split(key, 3)

    # small shapes; padding (1,1,1) per side -> padded (4, 8, 8) / (8, 8)
    inp = jax.random.normal(k_in, (B, 5, 2, 6, 6), jnp.float32)
    inp_surface = jax.random.normal(k_surf, (B, 4, 6, 6), jnp.float32)

    pad_h = (patch_size[1] - 1) * patch_size[1] // 2
    pad_w = (patch_size[2] - 1) * patch_size[2] // 2
    surface_hw_padded = (inp_surface.shape[2] + 2 * pad_h,
                         inp_surface.shape[3] + 2 * pad_w)

    params = init_patch_embedding_params(k_params, patch_size, dim,
                                         surface_hw_padded)

    out = patch_embedding_forward(inp, inp_surface, params, patch_size)
    out = jax.block_until_ready(out)

    # shape check: Zp+1 = 3, Hp = Wp = 4 -> [B, 48, dim]
    assert out.shape == (B, 3 * 4 * 4, dim), out.shape

    # correctness check of the Pallas (bf16-in / f32-accum) matmul path
    # against a plain f32 jnp reference.
    inp_p = jnp.pad(inp, ((0, 0), (0, 0), (1, 1), (1, 1), (1, 1)))
    patches3d, _ = _extract_patches_3d(inp_p, patch_size)
    w3d_mat = _weight3d_to_matmul(params["w3d"])
    ref = patches3d @ w3d_mat + params["b3d"][None, :]
    got = patch_matmul(patches3d, w3d_mat, params["b3d"])
    assert jnp.allclose(got, ref, atol=2e-2, rtol=2e-2), \
        float(jnp.max(jnp.abs(got - ref)))

    print("KERNEL_OK")
</pallas_src>

<mosaic_0001>
module attributes {stable_mosaic.version = 11 : i64} {
  func.func @_patch_matmul_kernel(%arg0: i32, %arg1: memref<64x128xbf16, #tpu.memory_space<vmem>>, %arg2: memref<128x128xbf16, #tpu.memory_space<vmem>>, %arg3: memref<1x128xf32, #tpu.memory_space<vmem>>, %arg4: memref<64x128xf32, #tpu.memory_space<vmem>>) attributes {dimension_semantics = [#tpu.dimension_semantics<parallel>], iteration_bounds = array<i64: 1>, scalar_prefetch = 0 : i64, scratch_operands = 0 : i64, tpu.core_type = #tpu.core_type<tc>, window_params = [{transform_indices = @transform_0, window_bounds = array<i64: 64, 128>}, {pipeline_mode = #tpu.pipeline_mode<synchronous>, transform_indices = @transform_1, window_bounds = array<i64: 128, 128>}, {pipeline_mode = #tpu.pipeline_mode<synchronous>, transform_indices = @transform_2, window_bounds = array<i64: 1, 128>}, {transform_indices = @transform_3, window_bounds = array<i64: 64, 128>}]} {
    %c0 = arith.constant 0 : index
    %c0_0 = arith.constant 0 : index
    %0 = vector.load %arg1[%c0, %c0_0] : memref<64x128xbf16, #tpu.memory_space<vmem>>, vector<64x128xbf16>
    %c0_1 = arith.constant 0 : index
    %c0_2 = arith.constant 0 : index
    %1 = vector.load %arg2[%c0_1, %c0_2] : memref<128x128xbf16, #tpu.memory_space<vmem>>, vector<128x128xbf16>
    %cst = arith.constant dense<0.000000e+00> : vector<64x128xf32>
    %2 = tpu.matmul %0, %1, %cst {dimension_numbers = #tpu.dot_dimension_numbers<[1], [0], [0], [1], [0, 0, 1, 1], [], []>} : vector<64x128xbf16>, vector<128x128xbf16>, vector<64x128xf32> -> vector<64x128xf32>
    %c0_3 = arith.constant 0 : index
    %c0_4 = arith.constant 0 : index
    %3 = vector.load %arg3[%c0_3, %c0_4] : memref<1x128xf32, #tpu.memory_space<vmem>>, vector<1x128xf32>
    %4 = vector.broadcast %3 : vector<1x128xf32> to vector<64x128xf32>
    %5 = arith.addf %2, %4 : vector<64x128xf32>
    %c0_5 = arith.constant 0 : index
    %c0_6 = arith.constant 0 : index
    %6 = vector.load %arg4[%c0_5, %c0_6] : memref<64x128xf32, #tpu.memory_space<vmem>>, vector<64x128xf32>
    tpu.vector_store %arg4[%c0_5, %c0_6], %5 {strides = array<i32>} : memref<64x128xf32, #tpu.memory_space<vmem>>, vector<64x128xf32>,
    return
  }
  func.func @transform_0(%arg0: i32) -> (i32, i32) {
    %c0_i32 = arith.constant 0 : i32
    %c0_i32_0 = arith.constant 0 : i32
    return %arg0, %c0_i32 : i32, i32
  }
  func.func @transform_1(%arg0: i32) -> (i32, i32) {
    %c0_i32 = arith.constant 0 : i32
    %c0_i32_0 = arith.constant 0 : i32
    %c0_i32_1 = arith.constant 0 : i32
    return %c0_i32, %c0_i32_0 : i32, i32
  }
  func.func @transform_2(%arg0: i32) -> (i32, i32) {
    %c0_i32 = arith.constant 0 : i32
    %c0_i32_0 = arith.constant 0 : i32
    %c0_i32_1 = arith.constant 0 : i32
    return %c0_i32, %c0_i32_0 : i32, i32
  }
  func.func @transform_3(%arg0: i32) -> (i32, i32) {
    %c0_i32 = arith.constant 0 : i32
    %c0_i32_0 = arith.constant 0 : i32
    return %arg0, %c0_i32 : i32, i32
  }
}

</mosaic_0001>

<llo_original>
// kernel: tpu_custom_call.1
$region0: #{tpu_custom_call.1}
  #allocation0 [shape = 'u32[]', space=smem, size = 0x4, offset = 0x4, fixed_abs, tag = 'smem constant byte address 0x4 - core index']
  #allocation1 [shape = 'u32[144,128]{1,0:T(1,128)}', space=vmem, size = 0x12000, scoped, tag = 'internal scratch']
  %s0 = inlined_call_operand.hbm [shape: bf16[64,128], index: 0, kind: input, shape index: {}]
  %s1 = inlined_call_operand.hbm [shape: bf16[128,128], index: 1, kind: input, shape index: {}]
  %s2 = inlined_call_operand.vmem [shape: f32[1,128], index: 2, kind: input, shape index: {}]
  %s3 = inlined_call_operand.hbm [shape: f32[64,128], index: 3, kind: output, shape index: {}]
  %s4 = sld [smem:[#allocation0]]
  $region30: #{tpu_custom_call.1} parent=0
    _
  %s6 = ssub.s32 1, %s4
  %s7 = scalar_select 0, %s6, %s4
  $region1: #{tpu_custom_call.1} parent=0
    #allocation2 [shape = 'u8[16384]{0}', space=vmem, size = 0x4000, scoped, tag = 'input window, operand 0, single buffered']
    #allocation3 [shape = 's32[1]{0}', space=sflag, size = 0x4, scoped, tag = 'scoped memory for tpu_custom_call.1']
    #allocation4 [shape = 's32[1]{0}', space=sflag, size = 0x4, scoped, tag = 'scoped memory for tpu_custom_call.1']
    #allocation5 [shape = 'u8[32768]{0}', space=vmem, size = 0x8000, scoped, tag = 'input window, operand 1, single buffered']
    #allocation6 [shape = 's32[1]{0}', space=sflag, size = 0x4, scoped, tag = 'scoped memory for tpu_custom_call.1']
    #allocation7 [shape = 'u8[32768]{0}', space=vmem, size = 0x8000, scoped, tag = 'output window, operand 0, single buffered']
    %8 = vsyncpa [#allocation3], 0
    %9 = vsyncpa [#allocation6], 0
    %10 = vsyncpa [#allocation4], 0
    // Predicated region
    $region2: #{tpu_custom_call.1} parent=1 // pred_check
      _
    $region3: #{tpu_custom_call.1} parent=1 // pred_check_branch
      %12 = sbr.rel (0) target = $region5
    $region4: #{tpu_custom_call.1} parent=1 // pred_region
      %s14 = ssub.s32 512, 512
      %15 = vsyncadd [#allocation3], %s14
      %s16 = sshll.u32 [#allocation2], 4
      %s17 = int_to_ptr.vmem [resolvable:$true] %s16
      %22 = dma.hbm_to_vmem [thread:$0]  %s0, 512, %s17, [#allocation3], 64, 64, 4
    $region5: #{tpu_custom_call.1} parent=1 // pred_fallthru
      _
    // Predicated region
    $region6: #{tpu_custom_call.1} parent=1 // pred_check
      _
    $region7: #{tpu_custom_call.1} parent=1 // pred_check_branch
      %24 = sbr.rel (0) target = $region9
    $region8: #{tpu_custom_call.1} parent=1 // pred_region
      %s26 = ssub.s32 1024, 1024
      %27 = vsyncadd [#allocation6], %s26
      %s28 = sshll.u32 [#allocation5], 4
      %s29 = int_to_ptr.vmem [resolvable:$true] %s28
      %34 = dma.hbm_to_vmem [thread:$0]  %s1, 1024, %s29, [#allocation6], 64, 64, 4
    $region9: #{tpu_custom_call.1} parent=1 // pred_fallthru
      _
    // Predicated region
    $region10: #{tpu_custom_call.1} parent=1 // pred_check
      _
    $region11: #{tpu_custom_call.1} parent=1 // pred_check_branch
      %36 = sbr.rel (0) target = $region13
    $region12: #{tpu_custom_call.1} parent=1 // pred_region
      _
    $region13: #{tpu_custom_call.1} parent=1 // pred_fallthru
      _
    // Predicated region
    $region14: #{tpu_custom_call.1} parent=1 // pred_check
      _
    $region15: #{tpu_custom_call.1} parent=1 // pred_check_branch
      %38 = sbr.rel (0) target = $region17
    $region16: #{tpu_custom_call.1} parent=1 // pred_region
      %39 = dma.done [#allocation3], 512
    $region17: #{tpu_custom_call.1} parent=1 // pred_fallthru
      _
    // Predicated region
    $region18: #{tpu_custom_call.1} parent=1 // pred_check
      _
    $region19: #{tpu_custom_call.1} parent=1 // pred_check_branch
      %41 = sbr.rel (0) target = $region21
    $region20: #{tpu_custom_call.1} parent=1 // pred_region
      %42 = dma.done [#allocation6], 1024
    $region21: #{tpu_custom_call.1} parent=1 // pred_fallthru
      _
    %v44 = vld [vmem:[#allocation2] sm:$0xf]
    %v45 = vld [vmem:[#allocation2 + $0x4] sm:$0xf]
    %v46 = vld [vmem:[#allocation2 + $0x8] sm:$0xf]
    %v47 = vld [vmem:[#allocation2 + $0xc] sm:$0xf]
    %v48 = vld [vmem:[#allocation2 + $0x10] sm:$0xf]
    %v49 = vld [vmem:[#allocation2 + $0x14] sm:$0xf]
    %v50 = vld [vmem:[#allocation2 + $0x18] sm:$0xf]
    %v51 = vld [vmem:[#allocation2 + $0x1c] sm:$0xf]
    %v52 = vld [vmem:[#allocation5] sm:$0xf]
    %v53 = vld [vmem:[#allocation5 + $0x4] sm:$0xf]
    %v54 = vld [vmem:[#allocation5 + $0x8] sm:$0xf]
    %v55 = vld [vmem:[#allocation5 + $0xc] sm:$0xf]
    %v56 = vld [vmem:[#allocation5 + $0x10] sm:$0xf]
    %v57 = vld [vmem:[#allocation5 + $0x14] sm:$0xf]
    %v58 = vld [vmem:[#allocation5 + $0x18] sm:$0xf]
    %v59 = vld [vmem:[#allocation5 + $0x1c] sm:$0xf]
    %v60 = vld [vmem:[#allocation5 + $0x20] sm:$0xf]
    %v61 = vld [vmem:[#allocation5 + $0x24] sm:$0xf]
    %v62 = vld [vmem:[#allocation5 + $0x28] sm:$0xf]
    %v63 = vld [vmem:[#allocation5 + $0x2c] sm:$0xf]
    %v64 = vld [vmem:[#allocation5 + $0x30] sm:$0xf]
    %v65 = vld [vmem:[#allocation5 + $0x34] sm:$0xf]
    %v66 = vld [vmem:[#allocation5 + $0x38] sm:$0xf]
    %v67 = vld [vmem:[#allocation5 + $0x3c] sm:$0xf]
    %v68 = vld [vmem:[%s2] sm:$0x1]
    %v70 = vlaneseq
    %v71 = vshrl.u32 %v70, 7
    %v72 = vsub.s32 0, %v71
    %v73 = vrot.slane %v68, %v72
    %v83 = vunpack.c.l.b16 %v44
    %v84 = vunpack.c.l.b16 %v45
    %v85 = vunpack.c.l.b16 %v46
    %v86 = vunpack.c.l.b16 %v47
    %v87 = vunpack.c.l.b16 %v48
    %v88 = vunpack.c.l.b16 %v49
    %v89 = vunpack.c.l.b16 %v50
    %v90 = vunpack.c.l.b16 %v51
    %v91 = vpack.c.b16 %v84, %v83
    %v92 = vpack.c.b16 %v86, %v85
    %v93 = vpack.c.b16 %v88, %v87
    %v94 = vpack.c.b16 %v90, %v89
    %v115 = vunpack.c.l.b16 %v52
    %v116 = vunpack.c.l.b16 %v53
    %v117 = vunpack.c.l.b16 %v54
    %v118 = vunpack.c.l.b16 %v55
    %v119 = vunpack.c.l.b16 %v56
    %v120 = vunpack.c.l.b16 %v57
    %v121 = vunpack.c.l.b16 %v58
    %v122 = vunpack.c.l.b16 %v59
    %v123 = vunpack.c.l.b16 %v60
    %v124 = vunpack.c.l.b16 %v61
    %v125 = vunpack.c.l.b16 %v62
    %v126 = vunpack.c.l.b16 %v63
    %v127 = vunpack.c.l.b16 %v64
    %v128 = vunpack.c.l.b16 %v65
    %v129 = vunpack.c.l.b16 %v66
    %v130 = vunpack.c.l.b16 %v67
    %v131 = vpack.c.b16 %v116, %v115
    %v132 = vpack.c.b16 %v118, %v117
    %v133 = vpack.c.b16 %v120, %v119
    %v134 = vpack.c.b16 %v122, %v121
    %v135 = vpack.c.b16 %v124, %v123
    %v136 = vpack.c.b16 %v126, %v125
    %v137 = vpack.c.b16 %v128, %v127
    %v138 = vpack.c.b16 %v130, %v129
    %147 = vmatprep.subr.bf16.mxu0 0
    %148 = vmatpush1.bf16.msra.mxu0 %v131
    %149 = vmatprep.subr.bf16.mxu0 0
    %150 = vmatpush1.bf16.msra.mxu0 %v132
    %151 = vmatprep.subr.bf16.mxu0 0
    %152 = vmatpush1.bf16.msra.mxu0 %v133
    %153 = vmatprep.subr.bf16.mxu0 0
    %154 = vmatpush1.bf16.msra.mxu0 %v134
    %155 = vmatprep.subr.bf16.mxu0 0
    %156 = vmatpush1.bf16.msra.mxu0 %v135
    %157 = vmatprep.subr.bf16.mxu0 0
    %158 = vmatpush1.bf16.msra.mxu0 %v136
    %159 = vmatprep.subr.bf16.mxu0 0
    %160 = vmatpush1.bf16.msra.mxu0 %v137
    %161 = vmatprep.subr.bf16.mxu0 0
    %162 = vmatpush1.bf16.msra.mxu0 %v138
    %163 = vmatprep.subr.bf16.mxu0 0
    %164 = vmatpush1.bf16.msra.mxu0 0
    %165 = vmatprep.subr.bf16.mxu0 0
    %166 = vmatpush1.bf16.msra.mxu0 0
    %167 = vmatprep.subr.bf16.mxu0 0
    %168 = vmatpush1.bf16.msra.mxu0 0
    %169 = vmatprep.subr.bf16.mxu0 0
    %170 = vmatpush1.bf16.msra.mxu0 0
    %171 = vmatprep.subr.bf16.mxu0 0
    %172 = vmatpush1.bf16.msra.mxu0 0
    %173 = vmatprep.subr.bf16.mxu0 0
    %174 = vmatpush1.bf16.msra.mxu0 0
    %175 = vmatprep.subr.bf16.mxu0 0
    %176 = vmatpush1.bf16.msra.mxu0 0
    %177 = vmatprep.subr.bf16.mxu0 0
    %178 = vmatpush1.bf16.msra.mxu0 0
    %179 = vmatprep.mubr.bf16.mxu0 0
    %180 = vmatmul.mubr.bf16.gmra.mrb[0].mxu0 %v91
    %v181 = vpop.f32.mrb[0].mxu0
    %v182 = vadd.f32 %v73, %v181
    %v183 = vpop.f32.mrb[0].mxu0
    %v184 = vpop.f32.mrb[0].mxu0
    %v185 = vadd.f32 %v73, %v184
    %v186 = vpop.f32.mrb[0].mxu0
    %187 = vmatprep.mubr.bf16.mxu0 0
    %188 = vmatmul.mubr.bf16.gmra.mrb[0].mxu0 %v92
    %v189 = vpop.f32.mrb[0].mxu0
    %v190 = vadd.f32 %v73, %v189
    %v191 = vpop.f32.mrb[0].mxu0
    %v192 = vpop.f32.mrb[0].mxu0
    %v193 = vadd.f32 %v73, %v192
    %v194 = vpop.f32.mrb[0].mxu0
    %195 = vmatprep.mubr.bf16.mxu0 0
    %196 = vmatmul.mubr.bf16.gmra.mrb[0].mxu0 %v93
    %v197 = vpop.f32.mrb[0].mxu0
    %v198 = vadd.f32 %v73, %v197
    %v199 = vpop.f32.mrb[0].mxu0
    %v200 = vpop.f32.mrb[0].mxu0
    %v201 = vadd.f32 %v73, %v200
    %v202 = vpop.f32.mrb[0].mxu0
    %203 = vmatprep.mubr.bf16.mxu0 0
    %204 = vmatmul.mubr.bf16.gmra.mrb[0].mxu0 %v94
    %v205 = vpop.f32.mrb[0].mxu0
    %v206 = vadd.f32 %v73, %v205
    %v207 = vpop.f32.mrb[0].mxu0
    %v208 = vpop.f32.mrb[0].mxu0
    %v209 = vadd.f32 %v73, %v208
    %v210 = vpop.f32.mrb[0].mxu0
    %211 = vdwg.mxu0
    %212 = vst [vmem:[#allocation7] sm:$0xff] %v182
    %213 = vst [vmem:[#allocation7 + $0x8] sm:$0xff] %v185
    %214 = vst [vmem:[#allocation7 + $0x10] sm:$0xff] %v190
    %215 = vst [vmem:[#allocation7 + $0x18] sm:$0xff] %v193
    %216 = vst [vmem:[#allocation7 + $0x20] sm:$0xff] %v198
    %217 = vst [vmem:[#allocation7 + $0x28] sm:$0xff] %v201
    %218 = vst [vmem:[#allocation7 + $0x30] sm:$0xff] %v206
    %219 = vst [vmem:[#allocation7 + $0x38] sm:$0xff] %v209
    // Predicated region
    $region22: #{tpu_custom_call.1} parent=1 // pred_check
      _
    $region23: #{tpu_custom_call.1} parent=1 // pred_check_branch
      %221 = sbr.rel (0) target = $region25
    $region24: #{tpu_custom_call.1} parent=1 // pred_region
      %s223 = ssub.s32 1024, 1024
      %224 = vsyncadd [#allocation4], %s223
      %s225 = sshll.u32 [#allocation7], 4
      %s226 = int_to_ptr.vmem [resolvable:$true] %s225
      %231 = dma.vmem_to_hbm [thread:$0]  %s226, 1024, %s3, [#allocation4], 128, 128, 8
    $region25: #{tpu_custom_call.1} parent=1 // pred_fallthru
      _
    // Predicated region
    $region26: #{tpu_custom_call.1} parent=1 // pred_check
      _
    $region27: #{tpu_custom_call.1} parent=1 // pred_check_branch
      %233 = sbr.rel (0) target = $region29
    $region28: #{tpu_custom_call.1} parent=1 // pred_region
      %234 = dma.done [#allocation4], 1024
    $region29: #{tpu_custom_call.1} parent=1 // pred_fallthru
      _
    %235 = vsyncpa [#allocation3], 1
    %236 = vsyncpa [#allocation6], 1
    %237 = vsyncpa [#allocation4], 1

</llo_original>
